<compile_context>
chip_gen: v5e
topology: v5e:2x2
jax: 0.10.0
libtpu: 0.0.40
codegen_flags: <defaults>
</compile_context>

<pallas_src>
import math

import jax
import jax.numpy as jnp
from jax.experimental import pallas as pl
from jax.experimental.pallas import tpu as pltpu

_LANES = 128
_SUBLANES = 8
_MAX_TILE_ROWS = 2048  # (2048, 128) f32 block = 1 MiB; 2 inputs x 2 buffers = 4 MiB


def _make_kernel(rows: int, tile_rows: int, tiles_per_chunk: int, eps: float):
    """Kernel closure over static shape info / eps."""
    need_mask = (rows % tile_rows) != 0  # last row-tile is ragged -> mask garbage

    def kernel(im_ref, ref_ref, out_ref):
        p = pl.program_id(0)
        t = pl.program_id(1)

        @pl.when(t == 0)
        def _():
            out_ref[...] = jnp.zeros_like(out_ref)

        im = im_ref[...].astype(jnp.float32)
        rf = ref_ref[...].astype(jnp.float32)

        if need_mask:
            # Zero out rows past the end of the real array (edge block holds
            # unspecified data).  Masking before any arithmetic is NaN-safe.
            row_start = (p * tiles_per_chunk + t) * tile_rows
            local_row = jax.lax.broadcasted_iota(jnp.int32, (tile_rows, _LANES), 0)
            valid = (local_row + row_start) < rows
            im = jnp.where(valid, im, 0.0)
            rf = jnp.where(valid, rf, 0.0)

        # Reinhard tonemap: clamp(x, min=0) / (1 + clamp(x, min=0))
        im = jnp.maximum(im, 0.0)
        im = im / (1.0 + im)
        rf = jnp.maximum(rf, 0.0)
        rf = rf / (1.0 + rf)

        diff = im - rf
        loss = (diff * diff) / (rf * rf + jnp.float32(eps))

        # Reduce (tile_rows, 128) -> (8, 128) with pure vreg adds (VALU slot),
        # then accumulate into the chunk-resident output block.
        partial = loss.reshape(tile_rows // _SUBLANES, _SUBLANES, _LANES).sum(axis=0)
        out_ref[...] += partial.reshape(1, _SUBLANES, _LANES)

    return kernel


def tonemapped_relative_mse(im: jax.Array, ref: jax.Array, eps: float = 0.01) -> jax.Array:
    """Equivalent of TonemappedRelativeMSE(eps)(im, ref). Returns a scalar f32."""
    assert im.shape == ref.shape, "im and ref must have identical shapes"
    n_total = int(math.prod(im.shape))

    # Flatten (free reshape), keep native dtype (cast happens in-kernel).
    im_flat = im.reshape(-1)
    ref_flat = ref.reshape(-1)

    # Pad only up to the next multiple of 8*128 = 1024 elements, and only when
    # needed.  Zero padding contributes exactly 0 to the loss sum.
    granule = _SUBLANES * _LANES
    n_pad = pl.cdiv(n_total, granule) * granule
    if n_pad != n_total:
        pad = n_pad - n_total
        im_flat = jnp.pad(im_flat, (0, pad))
        ref_flat = jnp.pad(ref_flat, (0, pad))

    rows = n_pad // _LANES            # multiple of 8
    im2d = im_flat.reshape(rows, _LANES)
    ref2d = ref_flat.reshape(rows, _LANES)

    tile_rows = min(_MAX_TILE_ROWS, rows)   # multiple of 8 (rows is)
    n_tiles = pl.cdiv(rows, tile_rows)
    # Outer parallel axis (megacore sharding on v7x); only when it splits evenly.
    n_par = 2 if (n_tiles >= 2 and n_tiles % 2 == 0) else 1
    tiles_per_chunk = n_tiles // n_par

    in_spec = pl.BlockSpec(
        (tile_rows, _LANES),
        lambda p, t: (p * tiles_per_chunk + t, 0),
    )
    out_spec = pl.BlockSpec(
        (1, _SUBLANES, _LANES),
        lambda p, t: (p, 0, 0),
    )

    partials = pl.pallas_call(
        _make_kernel(rows, tile_rows, tiles_per_chunk, eps),
        out_shape=jax.ShapeDtypeStruct((n_par, _SUBLANES, _LANES), jnp.float32),
        grid_spec=pltpu.PrefetchScalarGridSpec(
            num_scalar_prefetch=0,
            grid=(n_par, tiles_per_chunk),
            in_specs=[in_spec, in_spec],
            out_specs=out_spec,
        ),
        compiler_params=pltpu.CompilerParams(
            dimension_semantics=("parallel", "arbitrary"),
        ),
    )(im2d, ref2d)

    # Final tiny reduction + 0.5 / N scaling in the wrapper.
    return jnp.float32(0.5) * jnp.sum(partials) / jnp.float32(n_total)


def _reference(im, ref, eps=0.01):
    """Pure-JAX reference mirroring the PyTorch module."""
    im = jnp.maximum(im, 0.0)
    im = im / (1.0 + im)
    ref = jnp.maximum(ref, 0.0)
    ref = ref / (1.0 + ref)
    mse = (im - ref) ** 2
    loss = mse / (ref ** 2 + eps)
    return 0.5 * jnp.mean(loss)


if __name__ == "__main__":
    key = jax.random.PRNGKey(0)
    k_im, k_ref = jax.random.split(key)
    # NCHW like the PyTorch usage (HDR-ish radiance values, can be negative pre-clamp)
    shape = (2, 4, 16, 16)
    im = jax.random.normal(k_im, shape, dtype=jnp.float32) * 2.0 + 0.5
    ref = jax.random.normal(k_ref, shape, dtype=jnp.float32) * 2.0 + 0.5

    out = tonemapped_relative_mse(im, ref, eps=0.01)
    out = jax.block_until_ready(out)

    expected = _reference(im, ref, eps=0.01)
    assert jnp.allclose(out, expected, rtol=1e-5, atol=1e-6), (out, expected)
    print("KERNEL_OK")
</pallas_src>

<mosaic_0001>
module attributes {stable_mosaic.version = 11 : i64} {
  func.func @kernel(%arg0: i32, %arg1: i32, %arg2: memref<16x128xf32, #tpu.memory_space<vmem>>, %arg3: memref<16x128xf32, #tpu.memory_space<vmem>>, %arg4: memref<1x8x128xf32, #tpu.memory_space<vmem>>) attributes {dimension_semantics = [#tpu.dimension_semantics<parallel>, #tpu.dimension_semantics<arbitrary>], iteration_bounds = array<i64: 1, 1>, scalar_prefetch = 0 : i64, scratch_operands = 0 : i64, tpu.core_type = #tpu.core_type<tc>, window_params = [{transform_indices = @transform_0, window_bounds = array<i64: 16, 128>}, {transform_indices = @transform_1, window_bounds = array<i64: 16, 128>}, {transform_indices = @transform_2, window_bounds = array<i64: 1, 8, 128>}]} {
    %c0_i32 = arith.constant 0 : i32
    %0 = arith.cmpi eq, %arg1, %c0_i32 : i32
    %1 = arith.extui %0 : i1 to i32
    %c0_i32_0 = arith.constant 0 : i32
    %2 = arith.cmpi ne, %1, %c0_i32_0 : i32
    scf.if %2 {
      %cst_15 = arith.constant 0.000000e+00 : f32
      %27 = vector.broadcast %cst_15 : f32 to vector<1x8x128xf32>
      %c0_16 = arith.constant 0 : index
      %c0_17 = arith.constant 0 : index
      %c0_18 = arith.constant 0 : index
      %28 = vector.load %arg4[%c0_16, %c0_17, %c0_18] : memref<1x8x128xf32, #tpu.memory_space<vmem>>, vector<1x8x128xf32>
      tpu.vector_store %arg4[%c0_16, %c0_17, %c0_18], %27 {strides = array<i32>} : memref<1x8x128xf32, #tpu.memory_space<vmem>>, vector<1x8x128xf32>,
    } else {
    }
    %c0 = arith.constant 0 : index
    %c0_1 = arith.constant 0 : index
    %3 = vector.load %arg2[%c0, %c0_1] : memref<16x128xf32, #tpu.memory_space<vmem>>, vector<16x128xf32>
    %c0_2 = arith.constant 0 : index
    %c0_3 = arith.constant 0 : index
    %4 = vector.load %arg3[%c0_2, %c0_3] : memref<16x128xf32, #tpu.memory_space<vmem>>, vector<16x128xf32>
    %cst = arith.constant 0.000000e+00 : f32
    %5 = vector.broadcast %cst : f32 to vector<16x128xf32>
    %6 = arith.maximumf %3, %5 : vector<16x128xf32>
    %cst_4 = arith.constant 1.000000e+00 : f32
    %7 = vector.broadcast %cst_4 : f32 to vector<16x128xf32>
    %8 = arith.addf %7, %6 : vector<16x128xf32>
    %9 = arith.divf %6, %8 : vector<16x128xf32>
    %cst_5 = arith.constant 0.000000e+00 : f32
    %10 = vector.broadcast %cst_5 : f32 to vector<16x128xf32>
    %11 = arith.maximumf %4, %10 : vector<16x128xf32>
    %cst_6 = arith.constant 1.000000e+00 : f32
    %12 = vector.broadcast %cst_6 : f32 to vector<16x128xf32>
    %13 = arith.addf %12, %11 : vector<16x128xf32>
    %14 = arith.divf %11, %13 : vector<16x128xf32>
    %15 = arith.subf %9, %14 : vector<16x128xf32>
    %16 = arith.mulf %15, %15 : vector<16x128xf32>
    %17 = arith.mulf %14, %14 : vector<16x128xf32>
    %cst_7 = arith.constant 0.00999999977 : f32
    %18 = vector.broadcast %cst_7 : f32 to vector<16x128xf32>
    %19 = arith.addf %17, %18 : vector<16x128xf32>
    %20 = arith.divf %16, %19 : vector<16x128xf32>
    %21 = vector.shape_cast %20 : vector<16x128xf32> to vector<2x8x128xf32>
    %cst_8 = arith.constant dense<0.000000e+00> : vector<8x128xf32>
    %22 = vector.multi_reduction <add>, %21, %cst_8 [0] : vector<2x8x128xf32> to vector<8x128xf32>
    %c0_9 = arith.constant 0 : index
    %c0_10 = arith.constant 0 : index
    %c0_11 = arith.constant 0 : index
    %23 = vector.load %arg4[%c0_9, %c0_10, %c0_11] : memref<1x8x128xf32, #tpu.memory_space<vmem>>, vector<1x8x128xf32>
    %24 = vector.shape_cast %22 : vector<8x128xf32> to vector<1x8x128xf32>
    %25 = arith.addf %23, %24 : vector<1x8x128xf32>
    %c0_12 = arith.constant 0 : index
    %c0_13 = arith.constant 0 : index
    %c0_14 = arith.constant 0 : index
    %26 = vector.load %arg4[%c0_12, %c0_13, %c0_14] : memref<1x8x128xf32, #tpu.memory_space<vmem>>, vector<1x8x128xf32>
    tpu.vector_store %arg4[%c0_12, %c0_13, %c0_14], %25 {strides = array<i32>} : memref<1x8x128xf32, #tpu.memory_space<vmem>>, vector<1x8x128xf32>,
    return
  }
  func.func @transform_0(%arg0: i32, %arg1: i32) -> (i32, i32) {
    %c1_i32 = arith.constant 1 : i32
    %0 = arith.muli %arg0, %c1_i32 : i32
    %1 = arith.addi %0, %arg1 : i32
    %c0_i32 = arith.constant 0 : i32
    %c0_i32_0 = arith.constant 0 : i32
    return %1, %c0_i32 : i32, i32
  }
  func.func @transform_1(%arg0: i32, %arg1: i32) -> (i32, i32) {
    %c1_i32 = arith.constant 1 : i32
    %0 = arith.muli %arg0, %c1_i32 : i32
    %1 = arith.addi %0, %arg1 : i32
    %c0_i32 = arith.constant 0 : i32
    %c0_i32_0 = arith.constant 0 : i32
    return %1, %c0_i32 : i32, i32
  }
  func.func @transform_2(%arg0: i32, %arg1: i32) -> (i32, i32, i32) {
    %c0_i32 = arith.constant 0 : i32
    %c0_i32_0 = arith.constant 0 : i32
    %c0_i32_1 = arith.constant 0 : i32
    return %arg0, %c0_i32, %c0_i32_0 : i32, i32, i32
  }
}

</mosaic_0001>

<llo_original>
// kernel: tpu_custom_call.1
$region0: #{tpu_custom_call.1}
  #allocation0 [shape = 'u32[]', space=smem, size = 0x4, offset = 0x4, fixed_abs, tag = 'smem constant byte address 0x4 - core index']
  #allocation1 [shape = 'u32[72,128]{1,0:T(1,128)}', space=vmem, size = 0x9000, scoped, tag = 'internal scratch']
  %s0 = inlined_call_operand.hbm [shape: f32[16,128], index: 0, kind: input, shape index: {}]
  %s1 = inlined_call_operand.hbm [shape: f32[16,128], index: 1, kind: input, shape index: {}]
  %s2 = inlined_call_operand.hbm [shape: f32[1,8,128], index: 2, kind: output, shape index: {}]
  %s3 = sld [smem:[#allocation0]]
  $region30: #{tpu_custom_call.1} parent=0
    _
  %s5 = ssub.s32 1, %s3
  %s6 = scalar_select 0, %s5, %s3
  $region1: #{tpu_custom_call.1} parent=0
    #allocation2 [shape = 'u8[8192]{0}', space=vmem, size = 0x2000, scoped, tag = 'input window, operand 0, single buffered']
    #allocation3 [shape = 's32[1]{0}', space=sflag, size = 0x4, scoped, tag = 'scoped memory for tpu_custom_call.1']
    #allocation4 [shape = 's32[1]{0}', space=sflag, size = 0x4, scoped, tag = 'scoped memory for tpu_custom_call.1']
    #allocation5 [shape = 'u8[8192]{0}', space=vmem, size = 0x2000, scoped, tag = 'input window, operand 1, single buffered']
    #allocation6 [shape = 's32[1]{0}', space=sflag, size = 0x4, scoped, tag = 'scoped memory for tpu_custom_call.1']
    #allocation7 [shape = 'u8[4096]{0}', space=vmem, size = 0x1000, scoped, tag = 'output window, operand 0, single buffered']
    %7 = vsyncpa [#allocation3], 0
    %8 = vsyncpa [#allocation6], 0
    %9 = vsyncpa [#allocation4], 0
    // Predicated region
    $region2: #{tpu_custom_call.1} parent=1 // pred_check
      _
    $region3: #{tpu_custom_call.1} parent=1 // pred_check_branch
      %11 = sbr.rel (0) target = $region5
    $region4: #{tpu_custom_call.1} parent=1 // pred_region
      %s12 = sadd.s32 0, 0
      %s13 = smul.u32 2, %s12
      %15 = vsyncadd [#allocation3], 0
      %s16 = smul.addr %s13, 8
      %s17 = scalar_lea.hbm %s0, %s16
      %s18 = sshll.u32 %s17, 4
      %s19 = int_to_ptr.hbm [resolvable:$true] %s18
      %s20 = sshll.u32 [#allocation2], 4
      %s21 = int_to_ptr.vmem [resolvable:$true] %s20
      %26 = dma.hbm_to_vmem [thread:$0]  %s19, 256, %s21, [#allocation3], 128, 128, 8
    $region5: #{tpu_custom_call.1} parent=1 // pred_fallthru
      _
    // Predicated region
    $region6: #{tpu_custom_call.1} parent=1 // pred_check
      _
    $region7: #{tpu_custom_call.1} parent=1 // pred_check_branch
      %28 = sbr.rel (0) target = $region9
    $region8: #{tpu_custom_call.1} parent=1 // pred_region
      %s29 = sadd.s32 0, 0
      %s30 = smul.u32 2, %s29
      %32 = vsyncadd [#allocation6], 0
      %s33 = smul.addr %s30, 8
      %s34 = scalar_lea.hbm %s1, %s33
      %s35 = sshll.u32 %s34, 4
      %s36 = int_to_ptr.hbm [resolvable:$true] %s35
      %s37 = sshll.u32 [#allocation5], 4
      %s38 = int_to_ptr.vmem [resolvable:$true] %s37
      %43 = dma.hbm_to_vmem [thread:$0]  %s36, 256, %s38, [#allocation6], 128, 128, 8
    $region9: #{tpu_custom_call.1} parent=1 // pred_fallthru
      _
    // Predicated region
    $region10: #{tpu_custom_call.1} parent=1 // pred_check
      _
    $region11: #{tpu_custom_call.1} parent=1 // pred_check_branch
      %45 = sbr.rel (0) target = $region13
    $region12: #{tpu_custom_call.1} parent=1 // pred_region
      %47 = dma.done [#allocation3], 256
    $region13: #{tpu_custom_call.1} parent=1 // pred_fallthru
      _
    // Predicated region
    $region14: #{tpu_custom_call.1} parent=1 // pred_check
      _
    $region15: #{tpu_custom_call.1} parent=1 // pred_check_branch
      %49 = sbr.rel (0) target = $region17
    $region16: #{tpu_custom_call.1} parent=1 // pred_region
      %51 = dma.done [#allocation6], 256
    $region17: #{tpu_custom_call.1} parent=1 // pred_fallthru
      _
    %s52 = sadd.s32 0, 0
    %s53 = smul.u32 2, %s52
    %s54 = sadd.s32 0, 0
    %s55 = smul.u32 2, %s54
    %p56 = scmp.eq.s32.totalorder 0, 0
    // Predicated region
    $region18: #{tpu_custom_call.1} parent=1 // pred_check
      %p57 = pneg %p56
    $region19: #{tpu_custom_call.1} parent=1 // pred_check_branch
      %59 = sbr.rel (%p57) target = $region21
    $region20: #{tpu_custom_call.1} parent=1 // pred_region
      %60 = vst [vmem:[#allocation7] sm:$0xff] 0.0
    $region21: #{tpu_custom_call.1} parent=1 // pred_fallthru
      _
    %v61 = vld [vmem:[#allocation2] sm:$0xff]
    %v62 = vld [vmem:[#allocation2 + $0x8] sm:$0xff]
    %v63 = vld [vmem:[#allocation5] sm:$0xff]
    %v64 = vld [vmem:[#allocation5 + $0x8] sm:$0xff]
    %v65 = vmax.f32 %v61, 0.0
    %v66 = vmax.f32 %v62, 0.0
    %v67 = vadd.f32 %v65, 1.0
    %v68 = vadd.f32 %v66, 1.0
    %v69 = vrcp.pop %v67
    %v70 = vmul.f32 %v67, %v69
    %v71 = vsub.f32 1.0, %v70
    %v72 = vmul.f32 %v69, %v71
    %v73 = vadd.f32 %v69, %v72
    %vm74 = vweird.f32 %v67
    %vm75 = vweird.f32 %v69
    %vm76 = vmor %vm74, %vm75
    %v77 = vsel %vm76, %v69, %v73
    %v78 = vand.u32 2147483647, %v67
    %vm79 = vcmp.eq.f32.partialorder %v78, 8.507059e+37
    %v80 = vand.u32 %v67, 2147483648
    %v81 = vor.u32 1.1754944e-38, %v80
    %v82 = vsel %vm79, %v81, %v77
    %v83 = vmul.f32 %v65, %v82
    %v84 = vrcp.pop %v68
    %v85 = vmul.f32 %v68, %v84
    %v86 = vsub.f32 1.0, %v85
    %v87 = vmul.f32 %v84, %v86
    %v88 = vadd.f32 %v84, %v87
    %vm89 = vweird.f32 %v68
    %vm90 = vweird.f32 %v84
    %vm91 = vmor %vm89, %vm90
    %v92 = vsel %vm91, %v84, %v88
    %v93 = vand.u32 2147483647, %v68
    %vm94 = vcmp.eq.f32.partialorder %v93, 8.507059e+37
    %v95 = vand.u32 %v68, 2147483648
    %v96 = vor.u32 1.1754944e-38, %v95
    %v97 = vsel %vm94, %v96, %v92
    %v98 = vmul.f32 %v66, %v97
    %v99 = vmax.f32 %v63, 0.0
    %v100 = vmax.f32 %v64, 0.0
    %v101 = vadd.f32 %v99, 1.0
    %v102 = vadd.f32 %v100, 1.0
    %v103 = vrcp.pop %v101
    %v104 = vmul.f32 %v101, %v103
    %v105 = vsub.f32 1.0, %v104
    %v106 = vmul.f32 %v103, %v105
    %v107 = vadd.f32 %v103, %v106
    %vm108 = vweird.f32 %v101
    %vm109 = vweird.f32 %v103
    %vm110 = vmor %vm108, %vm109
    %v111 = vsel %vm110, %v103, %v107
    %v112 = vand.u32 2147483647, %v101
    %vm113 = vcmp.eq.f32.partialorder %v112, 8.507059e+37
    %v114 = vand.u32 %v101, 2147483648
    %v115 = vor.u32 1.1754944e-38, %v114
    %v116 = vsel %vm113, %v115, %v111
    %v117 = vmul.f32 %v99, %v116
    %v118 = vrcp.pop %v102
    %v119 = vmul.f32 %v102, %v118
    %v120 = vsub.f32 1.0, %v119
    %v121 = vmul.f32 %v118, %v120
    %v122 = vadd.f32 %v118, %v121
    %vm123 = vweird.f32 %v102
    %vm124 = vweird.f32 %v118
    %vm125 = vmor %vm123, %vm124
    %v126 = vsel %vm125, %v118, %v122
    %v127 = vand.u32 2147483647, %v102
    %vm128 = vcmp.eq.f32.partialorder %v127, 8.507059e+37
    %v129 = vand.u32 %v102, 2147483648
    %v130 = vor.u32 1.1754944e-38, %v129
    %v131 = vsel %vm128, %v130, %v126
    %v132 = vmul.f32 %v100, %v131
    %v133 = vsub.f32 %v83, %v117
    %v134 = vsub.f32 %v98, %v132
    %v135 = vmul.f32 %v133, %v133
    %v136 = vmul.f32 %v134, %v134
    %v137 = vmul.f32 %v117, %v117
    %v138 = vmul.f32 %v132, %v132
    %v139 = vadd.f32 %v137, 0.01
    %v140 = vadd.f32 %v138, 0.01
    %v141 = vrcp.pop %v139
    %v142 = vmul.f32 %v139, %v141
    %v143 = vsub.f32 1.0, %v142
    %v144 = vmul.f32 %v141, %v143
    %v145 = vadd.f32 %v141, %v144
    %vm146 = vweird.f32 %v139
    %vm147 = vweird.f32 %v141
    %vm148 = vmor %vm146, %vm147
    %v149 = vsel %vm148, %v141, %v145
    %v150 = vand.u32 2147483647, %v139
    %vm151 = vcmp.eq.f32.partialorder %v150, 8.507059e+37
    %v152 = vand.u32 %v139, 2147483648
    %v153 = vor.u32 1.1754944e-38, %v152
    %v154 = vsel %vm151, %v153, %v149
    %v155 = vmul.f32 %v135, %v154
    %v156 = vrcp.pop %v140
    %v157 = vmul.f32 %v140, %v156
    %v158 = vsub.f32 1.0, %v157
    %v159 = vmul.f32 %v156, %v158
    %v160 = vadd.f32 %v156, %v159
    %vm161 = vweird.f32 %v140
    %vm162 = vweird.f32 %v156
    %vm163 = vmor %vm161, %vm162
    %v164 = vsel %vm163, %v156, %v160
    %v165 = vand.u32 2147483647, %v140
    %vm166 = vcmp.eq.f32.partialorder %v165, 8.507059e+37
    %v167 = vand.u32 %v140, 2147483648
    %v168 = vor.u32 1.1754944e-38, %v167
    %v169 = vsel %vm166, %v168, %v164
    %v170 = vmul.f32 %v136, %v169
    %v171 = vadd.f32 %v155, %v170
    %v172 = vld [vmem:[#allocation7] sm:$0xff]
    %v173 = vadd.f32 %v172, %v171
    %174 = vst [vmem:[#allocation7] sm:$0xff] %v173
    // Predicated region
    $region22: #{tpu_custom_call.1} parent=1 // pred_check
      _
    $region23: #{tpu_custom_call.1} parent=1 // pred_check_branch
      %176 = sbr.rel (0) target = $region25
    $region24: #{tpu_custom_call.1} parent=1 // pred_region
      %178 = vsyncadd [#allocation4], 0
      %s180 = sshll.u32 [#allocation7], 4
      %s181 = int_to_ptr.vmem [resolvable:$true] %s180
      %s182 = sshll.u32 %s2, 4
      %s183 = int_to_ptr.hbm [resolvable:$true] %s182
      %185 = dma.vmem_to_hbm [thread:$0]  %s181, 128, %s183, [#allocation4]
    $region25: #{tpu_custom_call.1} parent=1 // pred_fallthru
      _
    // Predicated region
    $region26: #{tpu_custom_call.1} parent=1 // pred_check
      _
    $region27: #{tpu_custom_call.1} parent=1 // pred_check_branch
      %187 = sbr.rel (0) target = $region29
    $region28: #{tpu_custom_call.1} parent=1 // pred_region
      %189 = dma.done [#allocation4], 128
    $region29: #{tpu_custom_call.1} parent=1 // pred_fallthru
      _
    %190 = vsyncpa [#allocation3], 1
    %191 = vsyncpa [#allocation6], 1
    %192 = vsyncpa [#allocation4], 1

</llo_original>
